<compile_context>
chip_gen: v5e
topology: v5e:2x2
jax: 0.10.0
libtpu: 0.0.40
codegen_flags: <defaults>
</compile_context>

<pallas_src>
import functools

import jax
import jax.numpy as jnp
import numpy as np
from jax import lax
from jax.experimental import pallas as pl
from jax.experimental.pallas import tpu as pltpu

LANES = 128
SUBLANES = 8
MAX_BLOCK_BYTES = 4 * 1024 * 1024   # per-tile streaming size (double-buffered -> 8 MiB)
MIN_PALLAS_ELEMS = 8 * 1024         # smaller tensors: plain XLA reduce
DEFAULT_CORE_SPLITS = 2             # v7x has 2 TCs; harmless (serial) on v5e/v6e


def _cdiv(a, b):
    return -(-a // b)


def _round_up(x, m):
    return ((x + m - 1) // m) * m


def _abs_pow(x, p):
    """|x|^p with VPU-friendly lowering (repeated multiplies for integer p)."""
    if p == 1:
        return jnp.abs(x)
    if p == 2:
        return x * x
    if float(p).is_integer() and p > 0:
        a = jnp.abs(x)
        v = a
        for _ in range(int(p) - 1):
            v = v * a
        return v
    return jnp.abs(x) ** p


def _root(s, p):
    if p == 1:
        return s
    if p == 2:
        return jnp.sqrt(s)
    return s ** (1.0 / p)


def _sum_pow_kernel(tbl_ref, x_ref, o_ref, acc_ref, *, p, rows, block_rows, bps):
    """Streaming sum(|x|^p) over row-blocks of one tensor.

    Grid = (splits, blocks_per_split): axis 0 is 'parallel' (core split), axis 1
    is 'arbitrary' (carried accumulator).  tbl_ref (scalar-prefetched, SMEM)
    maps the linear step to a clamped, in-bounds block index; steps beyond the
    real block count and rows beyond `rows` are masked out.  acc_ref is a
    single (8, 128) f32 vreg-sized accumulator; o_ref[0, 0] (SMEM, one row per
    split) is written once, at the split's last step.
    """
    s = pl.program_id(0)
    i = pl.program_id(1)

    @pl.when(i == 0)
    def _init():
        acc_ref[...] = jnp.zeros_like(acc_ref)

    step = s * bps + i                      # logical (unclamped) block id
    row0 = step * block_rows
    rid = row0 + lax.broadcasted_iota(jnp.int32, (block_rows, LANES), 0)
    mask = rid < rows                       # kills edge-block tail AND padded steps

    x = x_ref[...].astype(jnp.float32)
    v = jnp.where(mask, _abs_pow(x, p), 0.0)
    # Partial reduce to one (8, 128) tile: pure vreg-to-vreg VPU adds.
    acc_ref[...] += v.reshape(-1, SUBLANES, LANES).sum(axis=0)

    @pl.when(i == bps - 1)
    def _finalize():
        o_ref[0, 0] = jnp.sum(acc_ref[...])


def _sum_abs_pow_pallas(w, p, *, max_block_rows=None, core_splits=DEFAULT_CORE_SPLITS):
    """sum(|w|^p) for one tensor, streamed from HBM exactly once (no slab copy)."""
    w = jnp.asarray(w)
    flat = jnp.reshape(w, (-1,))
    n = int(flat.shape[0])
    rows = n // LANES
    rem = n - rows * LANES

    if rem:
        # Ragged tail (< 128 elems) is summed by XLA; prefix feeds the kernel.
        x2d = flat[: rows * LANES].reshape(rows, LANES)
        tail = jnp.sum(_abs_pow(flat[rows * LANES:].astype(jnp.float32), p))
    else:
        x2d = flat.reshape(rows, LANES)     # free reshape, no copy
        tail = jnp.float32(0.0)

    itemsize = jnp.dtype(w.dtype).itemsize
    sub_mult = max(SUBLANES, 32 // itemsize)          # f32 -> 8, bf16 -> 16, int8 -> 32
    cap = max(sub_mult, (MAX_BLOCK_BYTES // (LANES * itemsize)) // sub_mult * sub_mult)
    if max_block_rows is not None:
        cap = max(sub_mult, min(cap, _round_up(max_block_rows, sub_mult)))
    block_rows = min(cap, _round_up(rows, sub_mult))
    nblocks = _cdiv(rows, block_rows)
    splits = max(1, min(int(core_splits), nblocks))
    bps = _cdiv(nblocks, splits)

    # Scalar-prefetched block-index table, clamped so padded steps re-read a
    # valid block (their contribution is masked to zero inside the kernel).
    blk_tbl = jnp.asarray(np.minimum(np.arange(splits * bps), nblocks - 1), jnp.int32)

    kernel = functools.partial(_sum_pow_kernel, p=p, rows=rows,
                               block_rows=block_rows, bps=bps)
    out = pl.pallas_call(
        kernel,
        out_shape=jax.ShapeDtypeStruct((splits, 1), jnp.float32),
        grid_spec=pltpu.PrefetchScalarGridSpec(
            num_scalar_prefetch=1,
            grid=(splits, bps),
            in_specs=[pl.BlockSpec((block_rows, LANES),
                                   lambda s, i, tbl: (tbl[s * bps + i], 0))],
            out_specs=pl.BlockSpec((1, 1), lambda s, i, tbl: (s, 0),
                                   memory_space=pltpu.SMEM),
            scratch_shapes=[pltpu.VMEM((SUBLANES, LANES), jnp.float32)],
        ),
        compiler_params=pltpu.CompilerParams(
            dimension_semantics=("parallel", "arbitrary"),
            vmem_limit_bytes=32 * 1024 * 1024),
        cost_estimate=pl.CostEstimate(
            flops=2 * rows * LANES,
            transcendentals=0,
            bytes_accessed=rows * LANES * itemsize + splits * 4),
    )(blk_tbl, x2d)
    return jnp.sum(out) + tail


def regularization_forward(named_params, weight_decay, p=2, *,
                           min_pallas_elems=MIN_PALLAS_ELEMS,
                           max_block_rows=None,
                           core_splits=DEFAULT_CORE_SPLITS):
    """Equivalent of Regularization.forward(model).

    named_params: dict name -> array (mimics model.named_parameters()).
    Only parameters whose name contains 'weight' contribute (same filter as
    get_weight()).
    """
    if weight_decay <= 0:
        raise ValueError("param weight_decay can not <=0")
    if p <= 0:
        raise ValueError("p-norm exponent must be > 0 for this kernel")

    reg = jnp.float32(0.0)
    for name, w in named_params.items():
        if "weight" not in name:
            continue
        w = jnp.asarray(w)
        n = int(w.size)
        if n >= min_pallas_elems:
            s = _sum_abs_pow_pallas(w, p, max_block_rows=max_block_rows,
                                    core_splits=core_splits)
        else:
            # Tiny tensors: a plain XLA reduce is cheaper than a kernel launch.
            s = jnp.sum(_abs_pow(w.astype(jnp.float32), p))
        reg = reg + _root(s, p)
    return jnp.float32(weight_decay) * reg


def regularization_reference(named_params, weight_decay, p=2):
    reg = jnp.float32(0.0)
    for name, w in named_params.items():
        if "weight" in name:
            w32 = jnp.asarray(w, jnp.float32)
            reg = reg + jnp.sum(jnp.abs(w32) ** p) ** (1.0 / p)
    return jnp.float32(weight_decay) * reg


if __name__ == "__main__":
    # Synthetic "model" parameters (deterministic), mimicking a small net.
    key = jax.random.PRNGKey(0)
    ks = jax.random.split(key, 6)
    named_params = {
        "conv1.weight": 0.1 * jax.random.normal(ks[0], (8, 3, 3, 3), jnp.float32),  # tiny -> XLA path
        "conv1.bias":   0.1 * jax.random.normal(ks[1], (8,), jnp.float32),          # filtered out
        "bn1.weight":   jnp.ones((8,), jnp.float32),                                 # tiny -> XLA path
        "bn1.bias":     jnp.zeros((8,), jnp.float32),                                # filtered out
        "fc1.weight":   0.05 * jax.random.normal(ks[2], (72, 200), jnp.float32),     # Pallas, ragged tail
        "fc2.weight":   0.05 * jax.random.normal(ks[3], (128, 256), jnp.float32),    # Pallas, zero-copy
        "proj.weight":  (0.05 * jax.random.normal(ks[4], (64, 256), jnp.float32)
                         ).astype(jnp.bfloat16),                                     # Pallas, native bf16
        "fc2.bias":     0.05 * jax.random.normal(ks[5], (128,), jnp.float32),        # filtered out
    }
    weight_decay = 0.01

    for p in (2, 1, 3):
        loss = jax.block_until_ready(regularization_forward(named_params, weight_decay, p=p))
        ref = regularization_reference(named_params, weight_decay, p=p)
        assert jnp.allclose(loss, ref, rtol=1e-5, atol=1e-6), (p, loss, ref)

    # Extra coverage: multi-block grid, 2-way core split, clamped padded steps
    # and edge-block row masking (block_rows=56 does not divide 256 rows).
    w = named_params["fc2.weight"]
    chk = jax.block_until_ready(
        _sum_abs_pow_pallas(w, 2, max_block_rows=56, core_splits=2))
    ref_chk = jnp.sum(jnp.square(w.astype(jnp.float32)))
    assert jnp.allclose(chk, ref_chk, rtol=1e-5, atol=1e-6), (chk, ref_chk)

    print("KERNEL_OK")
</pallas_src>

<mosaic_0001>
module attributes {stable_mosaic.version = 11 : i64} {
  func.func @_sum_pow_kernel(%arg0: i32, %arg1: i32, %arg2: memref<1xi32, #tpu.memory_space<smem>>, %arg3: memref<112x128xf32, #tpu.memory_space<vmem>>, %arg4: memref<1x1xf32, #tpu.memory_space<smem>>, %arg5: memref<8x128xf32, #tpu.memory_space<vmem>>) attributes {dimension_semantics = [#tpu.dimension_semantics<parallel>, #tpu.dimension_semantics<arbitrary>], iteration_bounds = array<i64: 1, 1>, scalar_prefetch = 1 : i64, scratch_operands = 1 : i64, tpu.core_type = #tpu.core_type<tc>, window_params = [{transform_indices = @transform_0, window_bounds = array<i64: 112, 128>}, {transform_indices = @transform_1, window_bounds = array<i64: 1, 1>}]} {
    %c0_i32 = arith.constant 0 : i32
    %0 = arith.cmpi eq, %arg1, %c0_i32 : i32
    %1 = arith.extui %0 : i1 to i32
    %c0_i32_0 = arith.constant 0 : i32
    %2 = arith.cmpi ne, %1, %c0_i32_0 : i32
    scf.if %2 {
      %cst_10 = arith.constant 0.000000e+00 : f32
      %23 = vector.broadcast %cst_10 : f32 to vector<8x128xf32>
      %c0_11 = arith.constant 0 : index
      %c0_12 = arith.constant 0 : index
      %24 = vector.load %arg5[%c0_11, %c0_12] : memref<8x128xf32, #tpu.memory_space<vmem>>, vector<8x128xf32>
      tpu.vector_store %arg5[%c0_11, %c0_12], %23 {strides = array<i32>} : memref<8x128xf32, #tpu.memory_space<vmem>>, vector<8x128xf32>,
    } else {
    }
    %c1_i32 = arith.constant 1 : i32
    %3 = arith.muli %arg0, %c1_i32 : i32
    %4 = arith.addi %3, %arg1 : i32
    %c112_i32 = arith.constant 112 : i32
    %5 = arith.muli %4, %c112_i32 : i32
    %6 = tpu.iota {dimensions = array<i32: 0>} : vector<112x128xi32>
    %7 = vector.broadcast %5 : i32 to vector<112x128xi32>
    %8 = arith.addi %7, %6 : vector<112x128xi32>
    %c112_i32_1 = arith.constant 112 : i32
    %9 = vector.broadcast %c112_i32_1 : i32 to vector<112x128xi32>
    %10 = arith.cmpi slt, %8, %9 : vector<112x128xi32>
    %c0 = arith.constant 0 : index
    %c0_2 = arith.constant 0 : index
    %11 = vector.load %arg3[%c0, %c0_2] : memref<112x128xf32, #tpu.memory_space<vmem>>, vector<112x128xf32>
    %12 = arith.mulf %11, %11 : vector<112x128xf32>
    %cst = arith.constant 0.000000e+00 : f32
    %13 = vector.broadcast %cst : f32 to vector<112x128xf32>
    %14 = arith.select %10, %12, %13 : vector<112x128xi1>, vector<112x128xf32>
    %c0_3 = arith.constant 0 : index
    %c0_4 = arith.constant 0 : index
    %15 = vector.load %arg5[%c0_3, %c0_4] : memref<8x128xf32, #tpu.memory_space<vmem>>, vector<8x128xf32>
    %16 = vector.shape_cast %14 : vector<112x128xf32> to vector<14x8x128xf32>
    %cst_5 = arith.constant dense<0.000000e+00> : vector<8x128xf32>
    %17 = vector.multi_reduction <add>, %16, %cst_5 [0] : vector<14x8x128xf32> to vector<8x128xf32>
    %18 = arith.addf %15, %17 : vector<8x128xf32>
    %c0_6 = arith.constant 0 : index
    %c0_7 = arith.constant 0 : index
    %19 = vector.load %arg5[%c0_6, %c0_7] : memref<8x128xf32, #tpu.memory_space<vmem>>, vector<8x128xf32>
    tpu.vector_store %arg5[%c0_6, %c0_7], %18 {strides = array<i32>} : memref<8x128xf32, #tpu.memory_space<vmem>>, vector<8x128xf32>,
    %c0_i32_8 = arith.constant 0 : i32
    %20 = arith.cmpi eq, %arg1, %c0_i32_8 : i32
    %21 = arith.extui %20 : i1 to i32
    %c0_i32_9 = arith.constant 0 : i32
    %22 = arith.cmpi ne, %21, %c0_i32_9 : i32
    scf.if %22 {
      %c0_10 = arith.constant 0 : index
      %c0_11 = arith.constant 0 : index
      %23 = vector.load %arg5[%c0_10, %c0_11] : memref<8x128xf32, #tpu.memory_space<vmem>>, vector<8x128xf32>
      %24 = vector.shape_cast %23 : vector<8x128xf32> to vector<1x8x128xf32>
      %cst_12 = arith.constant dense<0.000000e+00> : vector<1xf32>
      %25 = vector.multi_reduction <add>, %24, %cst_12 [1, 2] : vector<1x8x128xf32> to vector<1xf32>
      %26 = vector.shape_cast %25 : vector<1xf32> to vector<1x1x1xf32>
      %27 = vector.extract %26[0, 0, 0] : f32 from vector<1x1x1xf32>
      %c0_13 = arith.constant 0 : index
      %c0_14 = arith.constant 0 : index
      %28 = memref.load %arg4[%c0_13, %c0_14] : memref<1x1xf32, #tpu.memory_space<smem>>
      memref.store %27, %arg4[%c0_13, %c0_14] : memref<1x1xf32, #tpu.memory_space<smem>>
    } else {
    }
    return
  }
  func.func @transform_0(%arg0: i32, %arg1: i32, %arg2: memref<1xi32, #tpu.memory_space<smem>>) -> (i32, i32) {
    %c1_i32 = arith.constant 1 : i32
    %0 = arith.muli %arg0, %c1_i32 : i32
    %1 = arith.addi %0, %arg1 : i32
    %2 = arith.index_cast %1 : i32 to index
    %3 = memref.load %arg2[%2] : memref<1xi32, #tpu.memory_space<smem>>
    %c0_i32 = arith.constant 0 : i32
    %c0_i32_0 = arith.constant 0 : i32
    return %3, %c0_i32 : i32, i32
  }
  func.func @transform_1(%arg0: i32, %arg1: i32, %arg2: memref<1xi32, #tpu.memory_space<smem>>) -> (i32, i32) {
    %c0_i32 = arith.constant 0 : i32
    %c0_i32_0 = arith.constant 0 : i32
    return %arg0, %c0_i32 : i32, i32
  }
}

</mosaic_0001>

<llo_original>
// kernel: tpu_custom_call.1
$region0: #{tpu_custom_call.1}
  #allocation0 [shape = 'u32[]', space=smem, size = 0x4, offset = 0x4, fixed_abs, tag = 'smem constant byte address 0x4 - core index']
  #allocation1 [shape = 'u32[72,128]{1,0:T(1,128)}', space=vmem, size = 0x9000, scoped, tag = 'internal scratch']
  #allocation2 [shape = 'f32[8,128]{1,0:T(8,128)}', space=vmem, size = 0x1000, scoped, tag = 'scratch operand']
  #allocation3 [shape = 's32[1]{0}', space=sflag, size = 0x4, scoped, tag = 'scoped memory for tpu_custom_call.1']
  #allocation4 [shape = 's32[1]{0:T(128)S(6)}', space=smem, size = 0x200, scoped, tag = 'prefetched SMEM operand 0']
  %s0 = inlined_call_operand.<no memory space> [shape: s32[1], index: 0, kind: input, shape index: {}]
  %s1 = inlined_call_operand.hbm [shape: f32[112,128], index: 1, kind: input, shape index: {}]
  %s2 = inlined_call_operand.hbm [shape: f32[1,1], index: 2, kind: output, shape index: {}]
  %s3 = sld [smem:[#allocation0]]
  $region26: #{tpu_custom_call.1} parent=0
    _
  %s5 = ssub.s32 1, %s3
  %s6 = scalar_select 0, %s5, %s3
  %7 = sst [smem:[#allocation4]] %s0
  $region1: #{tpu_custom_call.1} parent=0
    #allocation5 [shape = 'u8[57344]{0}', space=vmem, size = 0xe000, scoped, tag = 'input window, operand 1, single buffered']
    #allocation6 [shape = 's32[1]{0}', space=sflag, size = 0x4, scoped, tag = 'scoped memory for tpu_custom_call.1']
    #allocation7 [shape = 's32[1]{0}', space=sflag, size = 0x4, scoped, tag = 'scoped memory for tpu_custom_call.1']
    #allocation8 [shape = 'u8[512]{0}', space=smem, size = 0x200, scoped, tag = 'output window, operand 0, single buffered']
    %8 = vsyncpa [#allocation6], 0
    %9 = vsyncpa [#allocation7], 0
    // Predicated region
    $region2: #{tpu_custom_call.1} parent=1 // pred_check
      _
    $region3: #{tpu_custom_call.1} parent=1 // pred_check_branch
      %11 = sbr.rel (0) target = $region5
    $region4: #{tpu_custom_call.1} parent=1 // pred_region
      %s12 = sadd.s32 0, 0
      %s13 = sld [smem:[#allocation4 + %s12]]
      %s14 = smul.u32 14, %s13
      %16 = vsyncadd [#allocation6], 0
      %s17 = smul.addr %s14, 8
      %s18 = scalar_lea.hbm %s1, %s17
      %s19 = sshll.u32 %s18, 4
      %s20 = int_to_ptr.hbm [resolvable:$true] %s19
      %s21 = sshll.u32 [#allocation5], 4
      %s22 = int_to_ptr.vmem [resolvable:$true] %s21
      %27 = dma.hbm_to_vmem [thread:$0]  %s20, 1792, %s22, [#allocation6], 128, 128, 8
    $region5: #{tpu_custom_call.1} parent=1 // pred_fallthru
      _
    // Predicated region
    $region6: #{tpu_custom_call.1} parent=1 // pred_check
      _
    $region7: #{tpu_custom_call.1} parent=1 // pred_check_branch
      %29 = sbr.rel (0) target = $region9
    $region8: #{tpu_custom_call.1} parent=1 // pred_region
      %31 = dma.done [#allocation6], 1792
    $region9: #{tpu_custom_call.1} parent=1 // pred_fallthru
      _
    %s32 = sadd.s32 0, 0
    %s33 = sld [smem:[#allocation4 + %s32]]
    %s34 = smul.u32 14, %s33
    %p35 = scmp.eq.s32.totalorder 0, 0
    // Predicated region
    $region10: #{tpu_custom_call.1} parent=1 // pred_check
      %p36 = pneg %p35
    $region11: #{tpu_custom_call.1} parent=1 // pred_check_branch
      %38 = sbr.rel (%p36) target = $region13
    $region12: #{tpu_custom_call.1} parent=1 // pred_region
      %39 = vst [vmem:[#allocation2] sm:$0xff] 0.0
    $region13: #{tpu_custom_call.1} parent=1 // pred_fallthru
      _
    %s40 = sadd.s32 0, 0
    %s41 = smul.u32 %s40, 112
    %v42 = vlaneseq
    %v43 = vshrl.u32 %v42, 7
    %v44 = vadd.s32 %v43, 8
    %v45 = vadd.s32 %v43, 16
    %v46 = vadd.s32 %v43, 24
    %v47 = vadd.s32 %v43, 32
    %v48 = vadd.s32 %v43, 40
    %v49 = vadd.s32 %v43, 48
    %v50 = vadd.s32 %v43, 56
    %v51 = vadd.s32 %v43, 64
    %v52 = vadd.s32 %v43, 72
    %v53 = vadd.s32 %v43, 80
    %v54 = vadd.s32 %v43, 88
    %v55 = vadd.s32 %v43, 96
    %v56 = vadd.s32 %v43, 104
    %v57 = vstv %s41
    %v58 = vadd.s32 %v57, %v43
    %v59 = vadd.s32 %v57, %v44
    %v60 = vadd.s32 %v57, %v45
    %v61 = vadd.s32 %v57, %v46
    %v62 = vadd.s32 %v57, %v47
    %v63 = vadd.s32 %v57, %v48
    %v64 = vadd.s32 %v57, %v49
    %v65 = vadd.s32 %v57, %v50
    %v66 = vadd.s32 %v57, %v51
    %v67 = vadd.s32 %v57, %v52
    %v68 = vadd.s32 %v57, %v53
    %v69 = vadd.s32 %v57, %v54
    %v70 = vadd.s32 %v57, %v55
    %v71 = vadd.s32 %v57, %v56
    %vm72 = vcmp.lt.s32.totalorder %v58, 112
    %vm73 = vcmp.lt.s32.totalorder %v59, 112
    %vm74 = vcmp.lt.s32.totalorder %v60, 112
    %vm75 = vcmp.lt.s32.totalorder %v61, 112
    %vm76 = vcmp.lt.s32.totalorder %v62, 112
    %vm77 = vcmp.lt.s32.totalorder %v63, 112
    %vm78 = vcmp.lt.s32.totalorder %v64, 112
    %vm79 = vcmp.lt.s32.totalorder %v65, 112
    %vm80 = vcmp.lt.s32.totalorder %v66, 112
    %vm81 = vcmp.lt.s32.totalorder %v67, 112
    %vm82 = vcmp.lt.s32.totalorder %v68, 112
    %vm83 = vcmp.lt.s32.totalorder %v69, 112
    %vm84 = vcmp.lt.s32.totalorder %v70, 112
    %vm85 = vcmp.lt.s32.totalorder %v71, 112
    %v86 = vld [vmem:[#allocation5] sm:$0xff]
    %v87 = vld [vmem:[#allocation5 + $0x8] sm:$0xff]
    %v88 = vld [vmem:[#allocation5 + $0x10] sm:$0xff]
    %v89 = vld [vmem:[#allocation5 + $0x18] sm:$0xff]
    %v90 = vld [vmem:[#allocation5 + $0x20] sm:$0xff]
    %v91 = vld [vmem:[#allocation5 + $0x28] sm:$0xff]
    %v92 = vld [vmem:[#allocation5 + $0x30] sm:$0xff]
    %v93 = vld [vmem:[#allocation5 + $0x38] sm:$0xff]
    %v94 = vld [vmem:[#allocation5 + $0x40] sm:$0xff]
    %v95 = vld [vmem:[#allocation5 + $0x48] sm:$0xff]
    %v96 = vld [vmem:[#allocation5 + $0x50] sm:$0xff]
    %v97 = vld [vmem:[#allocation5 + $0x58] sm:$0xff]
    %v98 = vld [vmem:[#allocation5 + $0x60] sm:$0xff]
    %v99 = vld [vmem:[#allocation5 + $0x68] sm:$0xff]
    %v100 = vmul.f32 %v86, %v86
    %v101 = vmul.f32 %v87, %v87
    %v102 = vmul.f32 %v88, %v88
    %v103 = vmul.f32 %v89, %v89
    %v104 = vmul.f32 %v90, %v90
    %v105 = vmul.f32 %v91, %v91
    %v106 = vmul.f32 %v92, %v92
    %v107 = vmul.f32 %v93, %v93
    %v108 = vmul.f32 %v94, %v94
    %v109 = vmul.f32 %v95, %v95
    %v110 = vmul.f32 %v96, %v96
    %v111 = vmul.f32 %v97, %v97
    %v112 = vmul.f32 %v98, %v98
    %v113 = vmul.f32 %v99, %v99
    %v114 = vsel %vm72, %v100, 0.0
    %v115 = vsel %vm73, %v101, 0.0
    %v116 = vsel %vm74, %v102, 0.0
    %v117 = vsel %vm75, %v103, 0.0
    %v118 = vsel %vm76, %v104, 0.0
    %v119 = vsel %vm77, %v105, 0.0
    %v120 = vsel %vm78, %v106, 0.0
    %v121 = vsel %vm79, %v107, 0.0
    %v122 = vsel %vm80, %v108, 0.0
    %v123 = vsel %vm81, %v109, 0.0
    %v124 = vsel %vm82, %v110, 0.0
    %v125 = vsel %vm83, %v111, 0.0
    %v126 = vsel %vm84, %v112, 0.0
    %v127 = vsel %vm85, %v113, 0.0
    %v128 = vld [vmem:[#allocation2] sm:$0xff]
    %v129 = vadd.f32 %v114, %v115
    %v130 = vadd.f32 %v129, %v116
    %v131 = vadd.f32 %v130, %v117
    %v132 = vadd.f32 %v131, %v118
    %v133 = vadd.f32 %v132, %v119
    %v134 = vadd.f32 %v133, %v120
    %v135 = vadd.f32 %v134, %v121
    %v136 = vadd.f32 %v135, %v122
    %v137 = vadd.f32 %v136, %v123
    %v138 = vadd.f32 %v137, %v124
    %v139 = vadd.f32 %v138, %v125
    %v140 = vadd.f32 %v139, %v126
    %v141 = vadd.f32 %v140, %v127
    %v142 = vadd.f32 %v128, %v141
    %143 = vst [vmem:[#allocation2] sm:$0xff] %v142
    // Predicated region
    $region14: #{tpu_custom_call.1} parent=1 // pred_check
      %p144 = pneg %p35
    $region15: #{tpu_custom_call.1} parent=1 // pred_check_branch
      %146 = sbr.rel (%p144) target = $region17
    $region16: #{tpu_custom_call.1} parent=1 // pred_region
      %v147 = vld [vmem:[#allocation2] sm:$0xff]
      %148 = vadd.xlane.f32.xlu0 %v147
      %v149 = vpop.xlane.xlu0 %148
      %v150 = vrot.slane %v149, 4
      %v151 = vadd.f32 %v149, %v150
      %v152 = vrot.slane %v151, 2
      %v153 = vadd.f32 %v151, %v152
      %v154 = vrot.slane %v153, 1
      %v155 = vadd.f32 %v153, %v154
      %s156 = vtos %v155
      %s157 = scalar_lea.smem [#allocation8], 0
      %158 = sst [smem:[%s157]] %s156
    $region17: #{tpu_custom_call.1} parent=1 // pred_fallthru
      _
    // Predicated region
    $region18: #{tpu_custom_call.1} parent=1 // pred_check
      _
    $region19: #{tpu_custom_call.1} parent=1 // pred_check_branch
      %160 = sbr.rel (0) target = $region21
    $region20: #{tpu_custom_call.1} parent=1 // pred_region
      %162 = vsyncadd [#allocation7], 0
      %s164 = sshll.u32 %s2, 4
      %s165 = int_to_ptr.hbm [resolvable:$true] %s164
      %167 = dma.smem_to_hbm [#allocation8], 16, %s165, [#allocation7]
    $region21: #{tpu_custom_call.1} parent=1 // pred_fallthru
      _
    // Predicated region
    $region22: #{tpu_custom_call.1} parent=1 // pred_check
      _
    $region23: #{tpu_custom_call.1} parent=1 // pred_check_branch
      %169 = sbr.rel (0) target = $region25
    $region24: #{tpu_custom_call.1} parent=1 // pred_region
      %171 = dma.done [#allocation7], 16
    $region25: #{tpu_custom_call.1} parent=1 // pred_fallthru
      _
    %172 = sfence
    %173 = vsyncpa [#allocation6], 1
    %174 = vsyncpa [#allocation7], 1

</llo_original>
